<compile_context>
chip_gen: v7x
topology: tpu7x:2x2x1
jax: 0.10.0
libtpu: 0.0.40
codegen_flags: <defaults>
</compile_context>

<pallas_src>
import jax
import jax.numpy as jnp
from jax.experimental import pallas as pl
from jax.experimental.pallas import tpu as pltpu


def _make_linear_kernel(use_bf16):
    def kernel(x_ref, w_ref, b_ref, o_ref):
        x = x_ref[...]
        w = w_ref[...]
        if use_bf16:
            # Cast on VMEM-resident tiles only (no extra HBM pass); the MXU
            # accumulates in f32 via preferred_element_type regardless.
            x = x.astype(jnp.bfloat16)
            w = w.astype(jnp.bfloat16)
        acc = jnp.dot(x, w, preferred_element_type=jnp.float32)
        o_ref[...] = (acc + b_ref[...]).astype(o_ref.dtype)   # bias is f32
    return kernel


def _round_up(n, m):
    return ((n + m - 1) // m) * m


def respiratory_regression_forward(x, weight_t, bias, *, block_m=8192,
                                   use_bf16=False,
                                   single_block_threshold=256):
    """out = x @ weight_t + bias  (equivalent to torch.nn.Linear forward).

    x:        (B, input_dim)        float32
    weight_t: (input_dim, classes)  float32   (transposed PyTorch weight)
    bias:     (classes,)            float32
    returns:  (B, classes)          same dtype as x

    block_m:  max batch-tile rows per grid step (multiple of 8).  Default
              8192 keeps the double-buffered, lane-padded footprint at
              ~16 MiB — fits all of v5e/v6e/v7x without raising limits.
    use_bf16: cast x/weight_t to bf16 INSIDE the kernel (v6e/v7x MXU fast
              path); accumulation and bias add stay f32.
    """
    B, D = x.shape
    D2, C = weight_t.shape
    assert D == D2, "weight_t must be (input_dim, num_classes)"
    out_dtype = x.dtype
    itemsize = jnp.dtype(out_dtype).itemsize

    # Bias stays f32 end-to-end (shaped (1, C) for broadcast over rows).
    bias_2d = bias.reshape(1, C).astype(jnp.float32)

    block_m = max(8, (block_m // 8) * 8)

    if B <= single_block_threshold:
        # Tiny batch: one full-array block (block dims == array dims, so the
        # (8,128) divisibility rule is trivially satisfied); grid of 1.
        tm = B
        grid = (1,)
    else:
        # Batch-tiled: x/out stream through VMEM (double buffered by
        # BlockSpec); weight/bias stay resident via constant index_maps.
        # Clamp tm so there are always >= 2 grid steps — lets the "parallel"
        # axis split across v7x's two TensorCores instead of idling one.
        half_rows = _round_up(pl.cdiv(B, 2), 8)
        tm = min(block_m, half_rows)
        grid = (pl.cdiv(B, tm),)

    # Lane-padded VMEM budget: x tile -> tm x 128 lanes x 4 B, out tile the
    # same (50 and 10 both pad to 128 lanes); x2 for double buffering.
    lane_padded_bytes = 2 * (tm * 128 * 4) * 2
    compiler_kwargs = dict(dimension_semantics=("parallel",))
    if lane_padded_bytes > 30 * 1024 * 1024:
        # Caller asked for a very large tile (v5e/v6e territory); raise the
        # scoped limit but stay well under v7x's 64 MiB physical VMEM.
        compiler_kwargs["vmem_limit_bytes"] = min(
            lane_padded_bytes + (4 << 20), 48 * 1024 * 1024)

    cost = pl.CostEstimate(
        flops=2 * B * D * C,
        transcendentals=0,
        bytes_accessed=(B * D + B * C + D * C + C) * itemsize,
    )

    return pl.pallas_call(
        _make_linear_kernel(use_bf16),
        out_shape=jax.ShapeDtypeStruct((B, C), out_dtype),
        grid=grid,
        in_specs=[
            pl.BlockSpec((tm, D), lambda i: (i, 0)),   # x: streamed per tile
            pl.BlockSpec((D, C), lambda i: (0, 0)),    # weight: VMEM-resident
            pl.BlockSpec((1, C), lambda i: (0, 0)),    # bias (f32): resident
        ],
        out_specs=pl.BlockSpec((tm, C), lambda i: (i, 0)),
        compiler_params=pltpu.CompilerParams(**compiler_kwargs),
        cost_estimate=cost,
    )(x, weight_t, bias_2d)


if __name__ == "__main__":
    num_classes = 10
    input_dim = 50

    key = jax.random.PRNGKey(0)
    kx, kw, kb, kx2 = jax.random.split(key, 4)

    # Deterministic synthetic parameters (PyTorch Linear-style uniform init).
    bound = 1.0 / (input_dim ** 0.5)
    weight = jax.random.uniform(kw, (num_classes, input_dim),
                                dtype=jnp.float32, minval=-bound, maxval=bound)
    bias = jax.random.uniform(kb, (num_classes,),
                              dtype=jnp.float32, minval=-bound, maxval=bound)
    weight_t = weight.T  # (input_dim, num_classes)

    # --- Small batch: single full-array block path -------------------------
    x_small = jax.random.normal(kx, (4, input_dim), dtype=jnp.float32)
    out_small = jax.block_until_ready(
        respiratory_regression_forward(x_small, weight_t, bias))
    ref_small = x_small @ weight_t + bias[None, :]
    assert out_small.shape == (4, num_classes)
    assert jnp.allclose(out_small, ref_small, atol=1e-4, rtol=1e-4)

    # --- Modest batch: exercises the tiled path (>=2 steps + partial tile) --
    B_tiled = 300
    x_tiled = jax.random.normal(kx2, (B_tiled, input_dim), dtype=jnp.float32)
    out_tiled = jax.block_until_ready(
        respiratory_regression_forward(x_tiled, weight_t, bias))
    ref_tiled = x_tiled @ weight_t + bias[None, :]
    assert out_tiled.shape == (B_tiled, num_classes)
    assert jnp.allclose(out_tiled, ref_tiled, atol=1e-4, rtol=1e-4)

    # --- In-kernel bf16 fast path (f32 accumulation + f32 bias) ------------
    out_bf16 = jax.block_until_ready(
        respiratory_regression_forward(x_tiled, weight_t, bias, use_bf16=True))
    assert out_bf16.shape == (B_tiled, num_classes)
    assert jnp.allclose(out_bf16, ref_tiled, atol=5e-2, rtol=5e-2)

    print("KERNEL_OK")
</pallas_src>

<mosaic_0001>
module attributes {stable_mosaic.version = 11 : i64} {
  func.func @kernel(%arg0: i32, %arg1: memref<4x50xf32, #tpu.memory_space<vmem>>, %arg2: memref<50x10xf32, #tpu.memory_space<vmem>>, %arg3: memref<1x10xf32, #tpu.memory_space<vmem>>, %arg4: memref<4x10xf32, #tpu.memory_space<vmem>>) attributes {dimension_semantics = [#tpu.dimension_semantics<parallel>], iteration_bounds = array<i64: 1>, scalar_prefetch = 0 : i64, scratch_operands = 0 : i64, tpu.core_type = #tpu.core_type<tc>, window_params = [{transform_indices = @transform_0, window_bounds = array<i64: 4, 50>}, {pipeline_mode = #tpu.pipeline_mode<synchronous>, transform_indices = @transform_1, window_bounds = array<i64: 50, 10>}, {pipeline_mode = #tpu.pipeline_mode<synchronous>, transform_indices = @transform_2, window_bounds = array<i64: 1, 10>}, {transform_indices = @transform_3, window_bounds = array<i64: 4, 10>}]} {
    %c0 = arith.constant 0 : index
    %c0_0 = arith.constant 0 : index
    %0 = vector.load %arg1[%c0, %c0_0] : memref<4x50xf32, #tpu.memory_space<vmem>>, vector<4x50xf32>
    %c0_1 = arith.constant 0 : index
    %c0_2 = arith.constant 0 : index
    %1 = vector.load %arg2[%c0_1, %c0_2] : memref<50x10xf32, #tpu.memory_space<vmem>>, vector<50x10xf32>
    %cst = arith.constant dense<0.000000e+00> : vector<4x10xf32>
    %2 = tpu.matmul %0, %1, %cst {dimension_numbers = #tpu.dot_dimension_numbers<[1], [0], [0], [1], [0, 0, 1, 1], [], []>} : vector<4x50xf32>, vector<50x10xf32>, vector<4x10xf32> -> vector<4x10xf32>
    %c0_3 = arith.constant 0 : index
    %c0_4 = arith.constant 0 : index
    %3 = vector.load %arg3[%c0_3, %c0_4] : memref<1x10xf32, #tpu.memory_space<vmem>>, vector<1x10xf32>
    %4 = vector.broadcast %3 : vector<1x10xf32> to vector<4x10xf32>
    %5 = arith.addf %2, %4 : vector<4x10xf32>
    %c0_5 = arith.constant 0 : index
    %c0_6 = arith.constant 0 : index
    %6 = vector.load %arg4[%c0_5, %c0_6] : memref<4x10xf32, #tpu.memory_space<vmem>>, vector<4x10xf32>
    tpu.vector_store %arg4[%c0_5, %c0_6], %5 {strides = array<i32>} : memref<4x10xf32, #tpu.memory_space<vmem>>, vector<4x10xf32>,
    return
  }
  func.func @transform_0(%arg0: i32) -> (i32, i32) {
    %c0_i32 = arith.constant 0 : i32
    %c0_i32_0 = arith.constant 0 : i32
    return %arg0, %c0_i32 : i32, i32
  }
  func.func @transform_1(%arg0: i32) -> (i32, i32) {
    %c0_i32 = arith.constant 0 : i32
    %c0_i32_0 = arith.constant 0 : i32
    %c0_i32_1 = arith.constant 0 : i32
    return %c0_i32, %c0_i32_0 : i32, i32
  }
  func.func @transform_2(%arg0: i32) -> (i32, i32) {
    %c0_i32 = arith.constant 0 : i32
    %c0_i32_0 = arith.constant 0 : i32
    %c0_i32_1 = arith.constant 0 : i32
    return %c0_i32, %c0_i32_0 : i32, i32
  }
  func.func @transform_3(%arg0: i32) -> (i32, i32) {
    %c0_i32 = arith.constant 0 : i32
    %c0_i32_0 = arith.constant 0 : i32
    return %arg0, %c0_i32 : i32, i32
  }
}

</mosaic_0001>

<llo_original>
// kernel: tpu_custom_call.1
$region0: #{tpu_custom_call.1}
  #allocation0 [shape = 'u32[]', space=smem, size = 0x4, offset = 0x4, fixed_abs, tag = 'smem constant byte address 0x4 - core index']
  #allocation1 [shape = 'u32[144,128]{1,0:T(1,128)}', space=vmem, size = 0x12000, scoped, tag = 'internal scratch']
  %s0 = inlined_call_operand.vmem [shape: f32[4,50], index: 0, kind: input, shape index: {}]
  %s1 = inlined_call_operand.vmem [shape: f32[50,10], index: 1, kind: input, shape index: {}]
  %s2 = inlined_call_operand.vmem [shape: f32[1,10], index: 2, kind: input, shape index: {}]
  %s3 = inlined_call_operand.hbm [shape: f32[4,10], index: 3, kind: output, shape index: {}]
  %s4 = sld [smem:[#allocation0]]
  $region22: #{tpu_custom_call.1} parent=0
    _
  %s6 = ssub.s32 1, %s4
  %s7 = scalar_select 0, %s6, %s4
  $region1: #{tpu_custom_call.1} parent=0
    #allocation2 [shape = 'u8[2048]{0}', space=vmem, size = 0x800, scoped, tag = 'output window, operand 0, single buffered']
    #allocation3 [shape = 's32[1]{0}', space=sflag, size = 0x4, scoped, tag = 'scoped memory for tpu_custom_call.1']
    %8 = vsyncpa [#allocation3], 0
    // Predicated region
    $region2: #{tpu_custom_call.1} parent=1 // pred_check
      _
    $region3: #{tpu_custom_call.1} parent=1 // pred_check_branch
      %10 = sbr.rel (0) target = $region5
    $region4: #{tpu_custom_call.1} parent=1 // pred_region
      _
    $region5: #{tpu_custom_call.1} parent=1 // pred_fallthru
      _
    // Predicated region
    $region6: #{tpu_custom_call.1} parent=1 // pred_check
      _
    $region7: #{tpu_custom_call.1} parent=1 // pred_check_branch
      %12 = sbr.rel (0) target = $region9
    $region8: #{tpu_custom_call.1} parent=1 // pred_region
      _
    $region9: #{tpu_custom_call.1} parent=1 // pred_fallthru
      _
    // Predicated region
    $region10: #{tpu_custom_call.1} parent=1 // pred_check
      _
    $region11: #{tpu_custom_call.1} parent=1 // pred_check_branch
      %14 = sbr.rel (0) target = $region13
    $region12: #{tpu_custom_call.1} parent=1 // pred_region
      _
    $region13: #{tpu_custom_call.1} parent=1 // pred_fallthru
      _
    %v15 = vld [vmem:[%s0] sm:$0xf]
    %v16 = vld [vmem:[%s1] sm:$0xff]
    %v17 = vld [vmem:[%s1 + $0x8] sm:$0xff]
    %v18 = vld [vmem:[%s1 + $0x10] sm:$0xff]
    %v19 = vld [vmem:[%s1 + $0x18] sm:$0xff]
    %v20 = vld [vmem:[%s1 + $0x20] sm:$0xff]
    %v21 = vld [vmem:[%s1 + $0x28] sm:$0xff]
    %v22 = vld [vmem:[%s1 + $0x30] sm:$0x3]
    %v23 = vld [vmem:[%s2] sm:$0x1]
    %v25 = vlaneseq
    %v26 = vshrl.u32 %v25, 7
    %v27 = vsub.s32 0, %v26
    %v28 = vrot.slane %v23, %v27
    %vm30 = vcmask 408576
    %v32 = vsel %vm30, %v15, 0
    %vm34 = vcmask 1041408
    %v36 = vsel %vm34, %v22, 0
    %38 = vmatprep.subr.mxu0 0.0
    %39 = vmatpush1.msra.mxu0 %v16
    %40 = vmatprep.subr.mxu0 0.0
    %41 = vmatpush1.msra.mxu0 %v17
    %42 = vmatprep.subr.mxu0 0.0
    %43 = vmatpush1.msra.mxu0 %v18
    %44 = vmatprep.subr.mxu0 0.0
    %45 = vmatpush1.msra.mxu0 %v19
    %46 = vmatprep.subr.mxu0 0.0
    %47 = vmatpush1.msra.mxu0 %v20
    %48 = vmatprep.subr.mxu0 0.0
    %49 = vmatpush1.msra.mxu0 %v21
    %50 = vmatprep.subr.mxu0 0.0
    %51 = vmatpush1.msra.mxu0 %v36
    %52 = vmatprep.subr.mxu0 0.0
    %53 = vmatpush1.msra.mxu0 0.0
    %54 = vmatprep.subr.mxu0 0.0
    %55 = vmatpush1.msra.mxu0 0.0
    %56 = vmatprep.subr.mxu0 0.0
    %57 = vmatpush1.msra.mxu0 0.0
    %58 = vmatprep.subr.mxu0 0.0
    %59 = vmatpush1.msra.mxu0 0.0
    %60 = vmatprep.subr.mxu0 0.0
    %61 = vmatpush1.msra.mxu0 0.0
    %62 = vmatprep.subr.mxu0 0.0
    %63 = vmatpush1.msra.mxu0 0.0
    %64 = vmatprep.subr.mxu0 0.0
    %65 = vmatpush1.msra.mxu0 0.0
    %66 = vmatprep.subr.mxu0 0.0
    %67 = vmatpush1.msra.mxu0 0.0
    %68 = vmatprep.subr.mxu0 0.0
    %69 = vmatpush1.msra.mxu0 0.0
    %70 = vmatprep.subr.mxu0 0.0
    %71 = vmatpush1.msra.mxu0 0.0
    %72 = vmatprep.subr.mxu0 0.0
    %73 = vmatpush1.msra.mxu0 0.0
    %74 = vmatprep.subr.mxu0 0.0
    %75 = vmatpush1.msra.mxu0 0.0
    %76 = vmatprep.subr.mxu0 0.0
    %77 = vmatpush1.msra.mxu0 0.0
    %78 = vmatprep.subr.mxu0 0.0
    %79 = vmatpush1.msra.mxu0 0.0
    %80 = vmatprep.subr.mxu0 0.0
    %81 = vmatpush1.msra.mxu0 0.0
    %82 = vmatprep.subr.mxu0 0.0
    %83 = vmatpush1.msra.mxu0 0.0
    %84 = vmatprep.subr.mxu0 0.0
    %85 = vmatpush1.msra.mxu0 0.0
    %86 = vmatprep.subr.mxu0 0.0
    %87 = vmatpush1.msra.mxu0 0.0
    %88 = vmatprep.subr.mxu0 0.0
    %89 = vmatpush1.msra.mxu0 0.0
    %90 = vmatprep.subr.mxu0 0.0
    %91 = vmatpush1.msra.mxu0 0.0
    %92 = vmatprep.subr.mxu0 0.0
    %93 = vmatpush1.msra.mxu0 0.0
    %94 = vmatprep.subr.mxu0 0.0
    %95 = vmatpush1.msra.mxu0 0.0
    %96 = vmatprep.subr.mxu0 0.0
    %97 = vmatpush1.msra.mxu0 0.0
    %98 = vmatprep.subr.mxu0 0.0
    %99 = vmatpush1.msra.mxu0 0.0
    %100 = vmatprep.subr.mxu0 0.0
    %101 = vmatpush1.msra.mxu0 0.0
    %102 = vmatprep.mubr.f32.mxu0 0.0
    %103 = vmatmul.mubr.f32.gmra.mrb[0].mxu0 %v32
    %v104 = vpop.f32.mrb[0].mxu0
    %v105 = vadd.f32 %v28, %v104
    %v106 = vpop.f32.mrb[0].mxu0
    %107 = vdwg.mxu0
    %vm108 = vcmask 76800
    %109 = vst.msk [vmem:[#allocation2] sm:$0xf] %vm108, %v105
    // Predicated region
    $region14: #{tpu_custom_call.1} parent=1 // pred_check
      _
    $region15: #{tpu_custom_call.1} parent=1 // pred_check_branch
      %111 = sbr.rel (0) target = $region17
    $region16: #{tpu_custom_call.1} parent=1 // pred_region
      %s113 = ssub.s32 64, 64
      %114 = vsyncadd [#allocation3], %s113
      %s116 = sshll.u32 [#allocation2], 4
      %s117 = int_to_ptr.vmem [resolvable:$true] %s116
      %119 = dma.vmem_to_hbm [thread:$0]  %s117, 64, %s3, [#allocation3]
    $region17: #{tpu_custom_call.1} parent=1 // pred_fallthru
      _
    // Predicated region
    $region18: #{tpu_custom_call.1} parent=1 // pred_check
      _
    $region19: #{tpu_custom_call.1} parent=1 // pred_check_branch
      %121 = sbr.rel (0) target = $region21
    $region20: #{tpu_custom_call.1} parent=1 // pred_region
      %122 = dma.done [#allocation3], 64
    $region21: #{tpu_custom_call.1} parent=1 // pred_fallthru
      _
    %123 = vsyncpa [#allocation3], 1

</llo_original>
